<compile_context>
chip_gen: v7x
topology: tpu7x:2x2x1
jax: 0.10.0
libtpu: 0.0.40
codegen_flags: <defaults>
</compile_context>

<pallas_src>
import jax
import jax.numpy as jnp
from jax.experimental import pallas as pl
from jax.experimental.pallas import tpu as pltpu


def _tanh_kernel(x_ref, o_ref):
    # Pure elementwise op on the current VMEM tile (EUP tanh; DMA is the
    # binding resource). OOB lanes of a ragged last block are masked on store,
    # so no explicit masking is needed for this elementwise kernel.
    o_ref[...] = jnp.tanh(x_ref[...])


def _device_tiling():
    """Pick (block_bytes, vmem_limit_bytes) per TPU generation."""
    try:
        kind = jax.devices()[0].device_kind.lower()
    except Exception:
        kind = ""
    if "7" in kind:
        # v7x: ~3.2 TB/s per TC -> bigger blocks to amortize per-step overhead.
        # Footprint = 2 bufs x (in+out) x 8 MiB = 32 MiB, which equals the
        # default scoped limit, so raise it (physical VMEM is 64 MiB).
        return 8 * 1024 * 1024, 40 * 1024 * 1024
    if "v6" in kind or "6e" in kind or "6 lite" in kind:
        # v6e: 4 MiB blocks -> 16 MiB footprint, inside the 32 MiB default.
        return 4 * 1024 * 1024, None
    # v5e and older / unknown: 2 MiB blocks -> 8 MiB footprint < 16 MiB default.
    return 2 * 1024 * 1024, None


def _run_tanh_2d(x2d, block_rows, vmem_limit):
    rows, lanes = x2d.shape
    itemsize = jnp.dtype(x2d.dtype).itemsize
    grid = (pl.cdiv(rows, block_rows),)  # ragged last block is fine (elementwise)
    # TODO(synk): on v7x, verify in a trace that the single "parallel" axis is
    # actually sharded across both TensorCores; if not, add a leading
    # CORE_PARALLEL axis of size 2.
    return pl.pallas_call(
        _tanh_kernel,
        out_shape=jax.ShapeDtypeStruct((rows, lanes), x2d.dtype),
        grid_spec=pltpu.PrefetchScalarGridSpec(
            num_scalar_prefetch=0,
            grid=grid,
            in_specs=[pl.BlockSpec((block_rows, lanes), lambda i: (i, 0))],
            out_specs=pl.BlockSpec((block_rows, lanes), lambda i: (i, 0)),
        ),
        compiler_params=pltpu.CompilerParams(
            dimension_semantics=("parallel",),
            vmem_limit_bytes=vmem_limit,
        ),
        cost_estimate=pl.CostEstimate(
            flops=0,
            transcendentals=rows * lanes,
            bytes_accessed=2 * rows * lanes * itemsize,
        ),
    )(x2d)


def tanh_pallas(x, *, target_block_bytes=None, small_n_threshold=16 * 1024):
    """Elementwise tanh via a Pallas TPU kernel (forward of the Tanh module)."""
    orig_shape = x.shape

    # torch's `input.tanh()` and jnp.tanh both promote integer inputs to float.
    if not jnp.issubdtype(x.dtype, jnp.floating):
        x = x.astype(jnp.float32)
    dtype = x.dtype

    n = x.size
    # Tiny/empty tensors: fixed pallas_call launch + per-step (~0.35 us)
    # overhead dominates; a fused XLA tanh is strictly faster.
    if n == 0 or n < small_n_threshold:
        return jnp.tanh(x)

    itemsize = jnp.dtype(dtype).itemsize
    # Native sublane packing: 8 (f32), 16 (bf16), 32 (int8/fp8).
    sub = max(8, 32 // itemsize)

    block_bytes, vmem_limit = _device_tiling()
    if target_block_bytes is not None:
        block_bytes = target_block_bytes

    # Lane-dense 2D view: widest lane count in {1024, 512, 256, 128} that
    # divides n exactly -> no wrapper-side pad/slice copies in the common case.
    lanes = None
    for cand in (1024, 512, 256, 128):
        if n % cand == 0:
            lanes = cand
            break

    if lanes is None:
        # Rare fallback (n not a multiple of 128): pad the flat view with
        # zeros; tanh(0) == 0 and the pad region is sliced off afterwards.
        lanes = 1024 if n >= 1024 * sub else 128
        n_padded = ((n + lanes - 1) // lanes) * lanes
        flat = jnp.pad(x.reshape(-1), (0, n_padded - n))
        rows = n_padded // lanes
        x2d = flat.reshape(rows, lanes)
        padded = True
    else:
        rows = n // lanes
        x2d = x.reshape(rows, lanes)
        padded = False

    # Rows per grid step: ~block_bytes worth, kept a multiple of the sublane
    # packing. If the whole array fits in one block, use the full row count
    # (a block dim equal to the full array dim needs no (8,128) alignment).
    block_rows = max(sub, (block_bytes // (lanes * itemsize)) // sub * sub)
    if block_rows >= rows:
        block_rows = rows

    out2d = _run_tanh_2d(x2d, block_rows, vmem_limit)

    out_flat = out2d.reshape(-1)
    if padded:
        out_flat = out_flat[:n]
    return out_flat.reshape(orig_shape)


class Tanh:
    """Minimal JAX/Pallas counterpart of the PyTorch `Tanh` module (forward only)."""

    def __init__(self):
        self.outputs = None

    def forward(self, x):
        self.outputs = tanh_pallas(x)
        return self.outputs

    # TODO(synk): backward (grad * (1 - tanh(x)**2)) not implemented; only the
    # forward pass is required here.

    def __call__(self, x):
        return self.forward(x)


if __name__ == "__main__":
    key = jax.random.PRNGKey(0)
    k1, k2, k3, k4 = jax.random.split(key, 4)

    # 1) Module-sized input (2,4,16,16): tiny -> short-circuits to fused XLA tanh.
    x_small = jax.random.normal(k1, (2, 4, 16, 16), dtype=jnp.float32)
    y_small = Tanh()(x_small)

    # 2) Kernel path: lane-dense (n % 1024 == 0), no padding, single block.
    x_med = jax.random.normal(k2, (2, 4, 128, 160), dtype=jnp.float32)
    y_med = tanh_pallas(x_med)

    # 3) Kernel path with a multi-step grid and ragged last block
    #    (small block size forced to exercise the cdiv/masked-store path).
    x_ragged = jax.random.normal(k3, (3, 195, 1024), dtype=jnp.float32)
    y_ragged = tanh_pallas(x_ragged, target_block_bytes=64 * 1024)

    # 4) bf16 with an element count that is not a multiple of 128
    #    -> rare pad/slice fallback path.
    x_pad = jax.random.normal(k4, (130, 131), dtype=jnp.bfloat16)
    y_pad = tanh_pallas(x_pad)

    for y in (y_small, y_med, y_ragged, y_pad):
        jax.block_until_ready(y)

    # Correctness checks against the plain JAX reference.
    assert y_small.shape == x_small.shape and y_small.dtype == x_small.dtype
    assert jnp.allclose(y_small, jnp.tanh(x_small), atol=1e-5, rtol=1e-5)

    assert y_med.shape == x_med.shape and y_med.dtype == x_med.dtype
    assert jnp.allclose(y_med, jnp.tanh(x_med), atol=1e-5, rtol=1e-5)

    assert y_ragged.shape == x_ragged.shape and y_ragged.dtype == x_ragged.dtype
    assert jnp.allclose(y_ragged, jnp.tanh(x_ragged), atol=1e-5, rtol=1e-5)

    assert y_pad.shape == x_pad.shape and y_pad.dtype == x_pad.dtype
    assert jnp.allclose(
        y_pad.astype(jnp.float32),
        jnp.tanh(x_pad).astype(jnp.float32),
        atol=2e-2,
        rtol=2e-2,
    )

    print("KERNEL_OK")
</pallas_src>

<mosaic_0001>
module attributes {stable_mosaic.version = 11 : i64} {
  func.func @_tanh_kernel(%arg0: i32, %arg1: memref<160x1024xf32, #tpu.memory_space<vmem>>, %arg2: memref<160x1024xf32, #tpu.memory_space<vmem>>) attributes {dimension_semantics = [#tpu.dimension_semantics<parallel>], iteration_bounds = array<i64: 1>, scalar_prefetch = 0 : i64, scratch_operands = 0 : i64, tpu.core_type = #tpu.core_type<tc>, window_params = [{transform_indices = @transform_0, window_bounds = array<i64: 160, 1024>}, {transform_indices = @transform_1, window_bounds = array<i64: 160, 1024>}]} {
    %c0 = arith.constant 0 : index
    %c0_0 = arith.constant 0 : index
    %0 = vector.load %arg1[%c0, %c0_0] : memref<160x1024xf32, #tpu.memory_space<vmem>>, vector<160x1024xf32>
    %1 = math.tanh %0 : vector<160x1024xf32>
    %c0_1 = arith.constant 0 : index
    %c0_2 = arith.constant 0 : index
    %2 = vector.load %arg2[%c0_1, %c0_2] : memref<160x1024xf32, #tpu.memory_space<vmem>>, vector<160x1024xf32>
    tpu.vector_store %arg2[%c0_1, %c0_2], %1 {strides = array<i32>} : memref<160x1024xf32, #tpu.memory_space<vmem>>, vector<160x1024xf32>,
    return
  }
  func.func @transform_0(%arg0: i32) -> (i32, i32) {
    %c0_i32 = arith.constant 0 : i32
    %c0_i32_0 = arith.constant 0 : i32
    return %arg0, %c0_i32 : i32, i32
  }
  func.func @transform_1(%arg0: i32) -> (i32, i32) {
    %c0_i32 = arith.constant 0 : i32
    %c0_i32_0 = arith.constant 0 : i32
    return %arg0, %c0_i32 : i32, i32
  }
}

</mosaic_0001>

<llo_original>
// kernel: tpu_custom_call.1
$region0: #{tpu_custom_call.1}
  #allocation0 [shape = 'u32[]', space=smem, size = 0x4, offset = 0x4, fixed_abs, tag = 'smem constant byte address 0x4 - core index']
  #allocation1 [shape = 'u32[144,128]{1,0:T(1,128)}', space=vmem, size = 0x12000, scoped, tag = 'internal scratch']
  %s0 = inlined_call_operand.hbm [shape: f32[160,1024], index: 0, kind: input, shape index: {}]
  %s1 = inlined_call_operand.hbm [shape: f32[160,1024], index: 1, kind: output, shape index: {}]
  %s2 = sld [smem:[#allocation0]]
  $region18: #{tpu_custom_call.1} parent=0
    _
  %s4 = ssub.s32 1, %s2
  %s5 = scalar_select 0, %s4, %s2
  $region1: #{tpu_custom_call.1} parent=0
    #allocation2 [shape = 'u8[655360]{0}', space=vmem, size = 0xa0000, scoped, tag = 'input window, operand 0, single buffered']
    #allocation3 [shape = 's32[1]{0}', space=sflag, size = 0x4, scoped, tag = 'scoped memory for tpu_custom_call.1']
    #allocation4 [shape = 's32[1]{0}', space=sflag, size = 0x4, scoped, tag = 'scoped memory for tpu_custom_call.1']
    #allocation5 [shape = 'u8[655360]{0}', space=vmem, size = 0xa0000, scoped, tag = 'output window, operand 0, single buffered']
    %6 = vsyncpa [#allocation3], 0
    %7 = vsyncpa [#allocation4], 0
    // Predicated region
    $region2: #{tpu_custom_call.1} parent=1 // pred_check
      _
    $region3: #{tpu_custom_call.1} parent=1 // pred_check_branch
      %9 = sbr.rel (0) target = $region5
    $region4: #{tpu_custom_call.1} parent=1 // pred_region
      %s11 = ssub.s32 20480, 20480
      %12 = vsyncadd [#allocation3], %s11
      %s13 = sshll.u32 [#allocation2], 4
      %s14 = int_to_ptr.vmem [resolvable:$true] %s13
      %19 = dma.hbm_to_vmem [thread:$0]  %s0, 20480, %s14, [#allocation3], 1024, 1024, 64
    $region5: #{tpu_custom_call.1} parent=1 // pred_fallthru
      _
    // Predicated region
    $region6: #{tpu_custom_call.1} parent=1 // pred_check
      _
    $region7: #{tpu_custom_call.1} parent=1 // pred_check_branch
      %21 = sbr.rel (0) target = $region9
    $region8: #{tpu_custom_call.1} parent=1 // pred_region
      %22 = dma.done [#allocation3], 20480
    $region9: #{tpu_custom_call.1} parent=1 // pred_fallthru
      _
    %v23 = vld [vmem:[#allocation2] sm:$0xff]
    %v24 = vld [vmem:[#allocation2 + $0x8] sm:$0xff]
    %v25 = vld [vmem:[#allocation2 + $0x10] sm:$0xff]
    %v26 = vld [vmem:[#allocation2 + $0x18] sm:$0xff]
    %v27 = vld [vmem:[#allocation2 + $0x20] sm:$0xff]
    %v28 = vld [vmem:[#allocation2 + $0x28] sm:$0xff]
    %v29 = vld [vmem:[#allocation2 + $0x30] sm:$0xff]
    %v30 = vld [vmem:[#allocation2 + $0x38] sm:$0xff]
    %v31 = vld [vmem:[#allocation2 + $0x40] sm:$0xff]
    %v32 = vld [vmem:[#allocation2 + $0x48] sm:$0xff]
    %v33 = vld [vmem:[#allocation2 + $0x50] sm:$0xff]
    %v34 = vld [vmem:[#allocation2 + $0x58] sm:$0xff]
    %v35 = vld [vmem:[#allocation2 + $0x60] sm:$0xff]
    %v36 = vld [vmem:[#allocation2 + $0x68] sm:$0xff]
    %v37 = vld [vmem:[#allocation2 + $0x70] sm:$0xff]
    %v38 = vld [vmem:[#allocation2 + $0x78] sm:$0xff]
    %v39 = vld [vmem:[#allocation2 + $0x80] sm:$0xff]
    %v40 = vld [vmem:[#allocation2 + $0x88] sm:$0xff]
    %v41 = vld [vmem:[#allocation2 + $0x90] sm:$0xff]
    %v42 = vld [vmem:[#allocation2 + $0x98] sm:$0xff]
    %v43 = vld [vmem:[#allocation2 + $0xa0] sm:$0xff]
    %v44 = vld [vmem:[#allocation2 + $0xa8] sm:$0xff]
    %v45 = vld [vmem:[#allocation2 + $0xb0] sm:$0xff]
    %v46 = vld [vmem:[#allocation2 + $0xb8] sm:$0xff]
    %v47 = vld [vmem:[#allocation2 + $0xc0] sm:$0xff]
    %v48 = vld [vmem:[#allocation2 + $0xc8] sm:$0xff]
    %v49 = vld [vmem:[#allocation2 + $0xd0] sm:$0xff]
    %v50 = vld [vmem:[#allocation2 + $0xd8] sm:$0xff]
    %v51 = vld [vmem:[#allocation2 + $0xe0] sm:$0xff]
    %v52 = vld [vmem:[#allocation2 + $0xe8] sm:$0xff]
    %v53 = vld [vmem:[#allocation2 + $0xf0] sm:$0xff]
    %v54 = vld [vmem:[#allocation2 + $0xf8] sm:$0xff]
    %v55 = vld [vmem:[#allocation2 + $0x100] sm:$0xff]
    %v56 = vld [vmem:[#allocation2 + $0x108] sm:$0xff]
    %v57 = vld [vmem:[#allocation2 + $0x110] sm:$0xff]
    %v58 = vld [vmem:[#allocation2 + $0x118] sm:$0xff]
    %v59 = vld [vmem:[#allocation2 + $0x120] sm:$0xff]
    %v60 = vld [vmem:[#allocation2 + $0x128] sm:$0xff]
    %v61 = vld [vmem:[#allocation2 + $0x130] sm:$0xff]
    %v62 = vld [vmem:[#allocation2 + $0x138] sm:$0xff]
    %v63 = vld [vmem:[#allocation2 + $0x140] sm:$0xff]
    %v64 = vld [vmem:[#allocation2 + $0x148] sm:$0xff]
    %v65 = vld [vmem:[#allocation2 + $0x150] sm:$0xff]
    %v66 = vld [vmem:[#allocation2 + $0x158] sm:$0xff]
    %v67 = vld [vmem:[#allocation2 + $0x160] sm:$0xff]
    %v68 = vld [vmem:[#allocation2 + $0x168] sm:$0xff]
    %v69 = vld [vmem:[#allocation2 + $0x170] sm:$0xff]
    %v70 = vld [vmem:[#allocation2 + $0x178] sm:$0xff]
    %v71 = vld [vmem:[#allocation2 + $0x180] sm:$0xff]
    %v72 = vld [vmem:[#allocation2 + $0x188] sm:$0xff]
    %v73 = vld [vmem:[#allocation2 + $0x190] sm:$0xff]
    %v74 = vld [vmem:[#allocation2 + $0x198] sm:$0xff]
    %v75 = vld [vmem:[#allocation2 + $0x1a0] sm:$0xff]
    %v76 = vld [vmem:[#allocation2 + $0x1a8] sm:$0xff]
    %v77 = vld [vmem:[#allocation2 + $0x1b0] sm:$0xff]
    %v78 = vld [vmem:[#allocation2 + $0x1b8] sm:$0xff]
    %v79 = vld [vmem:[#allocation2 + $0x1c0] sm:$0xff]
    %v80 = vld [vmem:[#allocation2 + $0x1c8] sm:$0xff]
    %v81 = vld [vmem:[#allocation2 + $0x1d0] sm:$0xff]
    %v82 = vld [vmem:[#allocation2 + $0x1d8] sm:$0xff]
    %v83 = vld [vmem:[#allocation2 + $0x1e0] sm:$0xff]
    %v84 = vld [vmem:[#allocation2 + $0x1e8] sm:$0xff]
    %v85 = vld [vmem:[#allocation2 + $0x1f0] sm:$0xff]
    %v86 = vld [vmem:[#allocation2 + $0x1f8] sm:$0xff]
    %v87 = vld [vmem:[#allocation2 + $0x200] sm:$0xff]
    %v88 = vld [vmem:[#allocation2 + $0x208] sm:$0xff]
    %v89 = vld [vmem:[#allocation2 + $0x210] sm:$0xff]
    %v90 = vld [vmem:[#allocation2 + $0x218] sm:$0xff]
    %v91 = vld [vmem:[#allocation2 + $0x220] sm:$0xff]
    %v92 = vld [vmem:[#allocation2 + $0x228] sm:$0xff]
    %v93 = vld [vmem:[#allocation2 + $0x230] sm:$0xff]
    %v94 = vld [vmem:[#allocation2 + $0x238] sm:$0xff]
    %v95 = vld [vmem:[#allocation2 + $0x240] sm:$0xff]
    %v96 = vld [vmem:[#allocation2 + $0x248] sm:$0xff]
    %v97 = vld [vmem:[#allocation2 + $0x250] sm:$0xff]
    %v98 = vld [vmem:[#allocation2 + $0x258] sm:$0xff]
    %v99 = vld [vmem:[#allocation2 + $0x260] sm:$0xff]
    %v100 = vld [vmem:[#allocation2 + $0x268] sm:$0xff]
    %v101 = vld [vmem:[#allocation2 + $0x270] sm:$0xff]
    %v102 = vld [vmem:[#allocation2 + $0x278] sm:$0xff]
    %v103 = vld [vmem:[#allocation2 + $0x280] sm:$0xff]
    %v104 = vld [vmem:[#allocation2 + $0x288] sm:$0xff]
    %v105 = vld [vmem:[#allocation2 + $0x290] sm:$0xff]
    %v106 = vld [vmem:[#allocation2 + $0x298] sm:$0xff]
    %v107 = vld [vmem:[#allocation2 + $0x2a0] sm:$0xff]
    %v108 = vld [vmem:[#allocation2 + $0x2a8] sm:$0xff]
    %v109 = vld [vmem:[#allocation2 + $0x2b0] sm:$0xff]
    %v110 = vld [vmem:[#allocation2 + $0x2b8] sm:$0xff]
    %v111 = vld [vmem:[#allocation2 + $0x2c0] sm:$0xff]
    %v112 = vld [vmem:[#allocation2 + $0x2c8] sm:$0xff]
    %v113 = vld [vmem:[#allocation2 + $0x2d0] sm:$0xff]
    %v114 = vld [vmem:[#allocation2 + $0x2d8] sm:$0xff]
    %v115 = vld [vmem:[#allocation2 + $0x2e0] sm:$0xff]
    %v116 = vld [vmem:[#allocation2 + $0x2e8] sm:$0xff]
    %v117 = vld [vmem:[#allocation2 + $0x2f0] sm:$0xff]
    %v118 = vld [vmem:[#allocation2 + $0x2f8] sm:$0xff]
    %v119 = vld [vmem:[#allocation2 + $0x300] sm:$0xff]
    %v120 = vld [vmem:[#allocation2 + $0x308] sm:$0xff]
    %v121 = vld [vmem:[#allocation2 + $0x310] sm:$0xff]
    %v122 = vld [vmem:[#allocation2 + $0x318] sm:$0xff]
    %v123 = vld [vmem:[#allocation2 + $0x320] sm:$0xff]
    %v124 = vld [vmem:[#allocation2 + $0x328] sm:$0xff]
    %v125 = vld [vmem:[#allocation2 + $0x330] sm:$0xff]
    %v126 = vld [vmem:[#allocation2 + $0x338] sm:$0xff]
    %v127 = vld [vmem:[#allocation2 + $0x340] sm:$0xff]
    %v128 = vld [vmem:[#allocation2 + $0x348] sm:$0xff]
    %v129 = vld [vmem:[#allocation2 + $0x350] sm:$0xff]
    %v130 = vld [vmem:[#allocation2 + $0x358] sm:$0xff]
    %v131 = vld [vmem:[#allocation2 + $0x360] sm:$0xff]
    %v132 = vld [vmem:[#allocation2 + $0x368] sm:$0xff]
    %v133 = vld [vmem:[#allocation2 + $0x370] sm:$0xff]
    %v134 = vld [vmem:[#allocation2 + $0x378] sm:$0xff]
    %v135 = vld [vmem:[#allocation2 + $0x380] sm:$0xff]
    %v136 = vld [vmem:[#allocation2 + $0x388] sm:$0xff]
    %v137 = vld [vmem:[#allocation2 + $0x390] sm:$0xff]
    %v138 = vld [vmem:[#allocation2 + $0x398] sm:$0xff]
    %v139 = vld [vmem:[#allocation2 + $0x3a0] sm:$0xff]
    %v140 = vld [vmem:[#allocation2 + $0x3a8] sm:$0xff]
    %v141 = vld [vmem:[#allocation2 + $0x3b0] sm:$0xff]
    %v142 = vld [vmem:[#allocation2 + $0x3b8] sm:$0xff]
    %v143 = vld [vmem:[#allocation2 + $0x3c0] sm:$0xff]
    %v144 = vld [vmem:[#allocation2 + $0x3c8] sm:$0xff]
    %v145 = vld [vmem:[#allocation2 + $0x3d0] sm:$0xff]
    %v146 = vld [vmem:[#allocation2 + $0x3d8] sm:$0xff]
    %v147 = vld [vmem:[#allocation2 + $0x3e0] sm:$0xff]
    %v148 = vld [vmem:[#allocation2 + $0x3e8] sm:$0xff]
    %v149 = vld [vmem:[#allocation2 + $0x3f0] sm:$0xff]
    %v150 = vld [vmem:[#allocation2 + $0x3f8] sm:$0xff]
    %v151 = vld [vmem:[#allocation2 + $0x400] sm:$0xff]
    %v152 = vld [vmem:[#allocation2 + $0x408] sm:$0xff]
    %v153 = vld [vmem:[#allocation2 + $0x410] sm:$0xff]
    %v154 = vld [vmem:[#allocation2 + $0x418] sm:$0xff]
    %v155 = vld [vmem:[#allocation2 + $0x420] sm:$0xff]
    %v156 = vld [vmem:[#allocation2 + $0x428] sm:$0xff]
    %v157 = vld [vmem:[#allocation2 + $0x430] sm:$0xff]
    %v158 = vld [vmem:[#allocation2 + $0x438] sm:$0xff]
    %v159 = vld [vmem:[#allocation2 + $0x440] sm:$0xff]
    %v160 = vld [vmem:[#allocation2 + $0x448] sm:$0xff]
    %v161 = vld [vmem:[#allocation2 + $0x450] sm:$0xff]
    %v162 = vld [vmem:[#allocation2 + $0x458] sm:$0xff]
    %v163 = vld [vmem:[#allocation2 + $0x460] sm:$0xff]
    %v164 = vld [vmem:[#allocation2 + $0x468] sm:$0xff]
    %v165 = vld [vmem:[#allocation2 + $0x470] sm:$0xff]
    %v166 = vld [vmem:[#allocation2 + $0x478] sm:$0xff]
    %v167 = vld [vmem:[#allocation2 + $0x480] sm:$0xff]
    %v168 = vld [vmem:[#allocation2 + $0x488] sm:$0xff]
    %v169 = vld [vmem:[#allocation2 + $0x490] sm:$0xff]
    %v170 = vld [vmem:[#allocation2 + $0x498] sm:$0xff]
    %v171 = vld [vmem:[#allocation2 + $0x4a0] sm:$0xff]
    %v172 = vld [vmem:[#allocation2 + $0x4a8] sm:$0xff]
    %v173 = vld [vmem:[#allocation2 + $0x4b0] sm:$0xff]
    %v174 = vld [vmem:[#allocation2 + $0x4b8] sm:$0xff]
    %v175 = vld [vmem:[#allocation2 + $0x4c0] sm:$0xff]
    %v176 = vld [vmem:[#allocation2 + $0x4c8] sm:$0xff]
    %v177 = vld [vmem:[#allocation2 + $0x4d0] sm:$0xff]
    %v178 = vld [vmem:[#allocation2 + $0x4d8] sm:$0xff]
    %v179 = vld [vmem:[#allocation2 + $0x4e0] sm:$0xff]
    %v180 = vld [vmem:[#allocation2 + $0x4e8] sm:$0xff]
    %v181 = vld [vmem:[#allocation2 + $0x4f0] sm:$0xff]
    %v182 = vld [vmem:[#allocation2 + $0x4f8] sm:$0xff]
    %v183 = vtanh.pop %v23
    %v184 = vtanh.pop %v24
    %v185 = vtanh.pop %v25
    %v186 = vtanh.pop %v26
    %v187 = vtanh.pop %v27
    %v188 = vtanh.pop %v28
    %v189 = vtanh.pop %v29
    %v190 = vtanh.pop %v30
    %v191 = vtanh.pop %v31
    %v192 = vtanh.pop %v32
    %v193 = vtanh.pop %v33
    %v194 = vtanh.pop %v34
    %v195 = vtanh.pop %v35
    %v196 = vtanh.pop %v36
    %v197 = vtanh.pop %v37
    %v198 = vtanh.pop %v38
    %v199 = vtanh.pop %v39
    %v200 = vtanh.pop %v40
    %v201 = vtanh.pop %v41
    %v202 = vtanh.pop %v42
    %v203 = vtanh.pop %v43
    %v204 = vtanh.pop %v44
    %v205 = vtanh.pop %v45
    %v206 = vtanh.pop %v46
    %v207 = vtanh.pop %v47
    %v208 = vtanh.pop %v48
    %v209 = vtanh.pop %v49
    %v210 = vtanh.pop %v50
    %v211 = vtanh.pop %v51
    %v212 = vtanh.pop %v52
    %v213 = vtanh.pop %v53
    %v214 = vtanh.pop %v54
    %v215 = vtanh.pop %v55
    %v216 = vtanh.pop %v56
    %v217 = vtanh.pop %v57
    %v218 = vtanh.pop %v58
    %v219 = vtanh.pop %v59
    %v220 = vtanh.pop %v60
    %v221 = vtanh.pop %v61
    %v222 = vtanh.pop %v62
    %v223 = vtanh.pop %v63
    %v224 = vtanh.pop %v64
    %v225 = vtanh.pop %v65
    %v226 = vtanh.pop %v66
    %v227 = vtanh.pop %v67
    %v228 = vtanh.pop %v68
    %v229 = vtanh.pop %v69
    %v230 = vtanh.pop %v70
    %v231 = vtanh.pop %v71
    %v232 = vtanh.pop %v72
    %v233 = vtanh.pop %v73
    %v234 = vtanh.pop %v74
    %v235 = vtanh.pop %v75
    %v236 = vtanh.pop %v76
    %v237 = vtanh.pop %v77
    %v238 = vtanh.pop %v78
    %v239 = vtanh.pop %v79
    %v240 = vtanh.pop %v80
    %v241 = vtanh.pop %v81
    %v242 = vtanh.pop %v82
    %v243 = vtanh.pop %v83
    %v244 = vtanh.pop %v84
    %v245 = vtanh.pop %v85
    %v246 = vtanh.pop %v86
    %v247 = vtanh.pop %v87
    %v248 = vtanh.pop %v88
    %v249 = vtanh.pop %v89
    %v250 = vtanh.pop %v90
    %v251 = vtanh.pop %v91
    %v252 = vtanh.pop %v92
    %v253 = vtanh.pop %v93
    %v254 = vtanh.pop %v94
    %v255 = vtanh.pop %v95
    %v256 = vtanh.pop %v96
    %v257 = vtanh.pop %v97
    %v258 = vtanh.pop %v98
    %v259 = vtanh.pop %v99
    %v260 = vtanh.pop %v100
    %v261 = vtanh.pop %v101
    %v262 = vtanh.pop %v102
    %v263 = vtanh.pop %v103
    %v264 = vtanh.pop %v104
    %v265 = vtanh.pop %v105
    %v266 = vtanh.pop %v106
    %v267 = vtanh.pop %v107
    %v268 = vtanh.pop %v108
    %v269 = vtanh.pop %v109
    %v270 = vtanh.pop %v110
    %v271 = vtanh.pop %v111
    %v272 = vtanh.pop %v112
    %v273 = vtanh.pop %v113
    %v274 = vtanh.pop %v114
    %v275 = vtanh.pop %v115
    %v276 = vtanh.pop %v116
    %v277 = vtanh.pop %v117
    %v278 = vtanh.pop %v118
    %v279 = vtanh.pop %v119
    %v280 = vtanh.pop %v120
    %v281 = vtanh.pop %v121
    %v282 = vtanh.pop %v122
    %v283 = vtanh.pop %v123
    %v284 = vtanh.pop %v124
    %v285 = vtanh.pop %v125
    %v286 = vtanh.pop %v126
    %v287 = vtanh.pop %v127
    %v288 = vtanh.pop %v128
    %v289 = vtanh.pop %v129
    %v290 = vtanh.pop %v130
    %v291 = vtanh.pop %v131
    %v292 = vtanh.pop %v132
    %v293 = vtanh.pop %v133
    %v294 = vtanh.pop %v134
    %v295 = vtanh.pop %v135
    %v296 = vtanh.pop %v136
    %v297 = vtanh.pop %v137
    %v298 = vtanh.pop %v138
    %v299 = vtanh.pop %v139
    %v300 = vtanh.pop %v140
    %v301 = vtanh.pop %v141
    %v302 = vtanh.pop %v142
    %v303 = vtanh.pop %v143
    %v304 = vtanh.pop %v144
    %v305 = vtanh.pop %v145
    %v306 = vtanh.pop %v146
    %v307 = vtanh.pop %v147
    %v308 = vtanh.pop %v148
    %v309 = vtanh.pop %v149
    %v310 = vtanh.pop %v150
    %v311 = vtanh.pop %v151
    %v312 = vtanh.pop %v152
    %v313 = vtanh.pop %v153
    %v314 = vtanh.pop %v154
    %v315 = vtanh.pop %v155
    %v316 = vtanh.pop %v156
    %v317 = vtanh.pop %v157
    %v318 = vtanh.pop %v158
    %v319 = vtanh.pop %v159
    %v320 = vtanh.pop %v160
    %v321 = vtanh.pop %v161
    %v322 = vtanh.pop %v162
    %v323 = vtanh.pop %v163
    %v324 = vtanh.pop %v164
    %v325 = vtanh.pop %v165
    %v326 = vtanh.pop %v166
    %v327 = vtanh.pop %v167
    %v328 = vtanh.pop %v168
    %v329 = vtanh.pop %v169
    %v330 = vtanh.pop %v170
    %v331 = vtanh.pop %v171
    %v332 = vtanh.pop %v172
    %v333 = vtanh.pop %v173
    %v334 = vtanh.pop %v174
    %v335 = vtanh.pop %v175
    %v336 = vtanh.pop %v176
    %v337 = vtanh.pop %v177
    %v338 = vtanh.pop %v178
    %v339 = vtanh.pop %v179
    %v340 = vtanh.pop %v180
    %v341 = vtanh.pop %v181
    %v342 = vtanh.pop %v182
    %343 = vst [vmem:[#allocation5] sm:$0xff] %v183
    %344 = vst [vmem:[#allocation5 + $0x8] sm:$0xff] %v184
    %345 = vst [vmem:[#allocation5 + $0x10] sm:$0xff] %v185
    %346 = vst [vmem:[#allocation5 + $0x18] sm:$0xff] %v186
    %347 = vst [vmem:[#allocation5 + $0x20] sm:$0xff] %v187
    %348 = vst [vmem:[#allocation5 + $0x28] sm:$0xff] %v188
    %349 = vst [vmem:[#allocation5 + $0x30] sm:$0xff] %v189
    %350 = vst [vmem:[#allocation5 + $0x38] sm:$0xff] %v190
    %351 = vst [vmem:[#allocation5 + $0x40] sm:$0xff] %v191
    %352 = vst [vmem:[#allocation5 + $0x48] sm:$0xff] %v192
    %353 = vst [vmem:[#allocation5 + $0x50] sm:$0xff] %v193
    %354 = vst [vmem:[#allocation5 + $0x58] sm:$0xff] %v194
    %355 = vst [vmem:[#allocation5 + $0x60] sm:$0xff] %v195
    %356 = vst [vmem:[#allocation5 + $0x68] sm:$0xff] %v196
    %357 = vst [vmem:[#allocation5 + $0x70] sm:$0xff] %v197
    %358 = vst [vmem:[#allocation5 + $0x78] sm:$0xff] %v198
    %359 = vst [vmem:[#allocation5 + $0x80] sm:$0xff] %v199
    %360 = vst [vmem:[#allocation5 + $0x88] sm:$0xff] %v200
    %361 = vst [vmem:[#allocation5 + $0x90] sm:$0xff] %v201
    %362 = vst [vmem:[#allocation5 + $0x98] sm:$0xff] %v202
    %363 = vst [vmem:[#allocation5 + $0xa0] sm:$0xff] %v203
    %364 = vst [vmem:[#allocation5 + $0xa8] sm:$0xff] %v204
    %365 = vst [vmem:[#allocation5 + $0xb0] sm:$0xff] %v205
    %366 = vst [vmem:[#allocation5 + $0xb8] sm:$0xff] %v206
    %367 = vst [vmem:[#allocation5 + $0xc0] sm:$0xff] %v207
    %368 = vst [vmem:[#allocation5 + $0xc8] sm:$0xff] %v208
    %369 = vst [vmem:[#allocation5 + $0xd0] sm:$0xff] %v209
    %370 = vst [vmem:[#allocation5 + $0xd8] sm:$0xff] %v210
    %371 = vst [vmem:[#allocation5 + $0xe0] sm:$0xff] %v211
    %372 = vst [vmem:[#allocation5 + $0xe8] sm:$0xff] %v212
    %373 = vst [vmem:[#allocation5 + $0xf0] sm:$0xff] %v213
    %374 = vst [vmem:[#allocation5 + $0xf8] sm:$0xff] %v214
    %375 = vst [vmem:[#allocation5 + $0x100] sm:$0xff] %v215
    %376 = vst [vmem:[#allocation5 + $0x108] sm:$0xff] %v216
    %377 = vst [vmem:[#allocation5 + $0x110] sm:$0xff] %v217
    %378 = vst [vmem:[#allocation5 + $0x118] sm:$0xff] %v218
    %379 = vst [vmem:[#allocation5 + $0x120] sm:$0xff] %v219
    %380 = vst [vmem:[#allocation5 + $0x128] sm:$0xff] %v220
    %381 = vst [vmem:[#allocation5 + $0x130] sm:$0xff] %v221
    %382 = vst [vmem:[#allocation5 + $0x138] sm:$0xff] %v222
    %383 = vst [vmem:[#allocation5 + $0x140] sm:$0xff] %v223
    %384 = vst [vmem:[#allocation5 + $0x148] sm:$0xff] %v224
    %385 = vst [vmem:[#allocation5 + $0x150] sm:$0xff] %v225
    %386 = vst [vmem:[#allocation5 + $0x158] sm:$0xff] %v226
    %387 = vst [vmem:[#allocation5 + $0x160] sm:$0xff] %v227
    %388 = vst [vmem:[#allocation5 + $0x168] sm:$0xff] %v228
    %389 = vst [vmem:[#allocation5 + $0x170] sm:$0xff] %v229
    %390 = vst [vmem:[#allocation5 + $0x178] sm:$0xff] %v230
    %391 = vst [vmem:[#allocation5 + $0x180] sm:$0xff] %v231
    %392 = vst [vmem:[#allocation5 + $0x188] sm:$0xff] %v232
    %393 = vst [vmem:[#allocation5 + $0x190] sm:$0xff] %v233
    %394 = vst [vmem:[#allocation5 + $0x198] sm:$0xff] %v234
    %395 = vst [vmem:[#allocation5 + $0x1a0] sm:$0xff] %v235
    %396 = vst [vmem:[#allocation5 + $0x1a8] sm:$0xff] %v236
    %397 = vst [vmem:[#allocation5 + $0x1b0] sm:$0xff] %v237
    %398 = vst [vmem:[#allocation5 + $0x1b8] sm:$0xff] %v238
    %399 = vst [vmem:[#allocation5 + $0x1c0] sm:$0xff] %v239
    %400 = vst [vmem:[#allocation5 + $0x1c8] sm:$0xff] %v240
    %401 = vst [vmem:[#allocation5 + $0x1d0] sm:$0xff] %v241
    %402 = vst [vmem:[#allocation5 + $0x1d8] sm:$0xff] %v242
    %403 = vst [vmem:[#allocation5 + $0x1e0] sm:$0xff] %v243
    %404 = vst [vmem:[#allocation5 + $0x1e8] sm:$0xff] %v244
    %405 = vst [vmem:[#allocation5 + $0x1f0] sm:$0xff] %v245
    %406 = vst [vmem:[#allocation5 + $0x1f8] sm:$0xff] %v246
    %407 = vst [vmem:[#allocation5 + $0x200] sm:$0xff] %v247
    %408 = vst [vmem:[#allocation5 + $0x208] sm:$0xff] %v248
    %409 = vst [vmem:[#allocation5 + $0x210] sm:$0xff] %v249
    %410 = vst [vmem:[#allocation5 + $0x218] sm:$0xff] %v250
    %411 = vst [vmem:[#allocation5 + $0x220] sm:$0xff] %v251
    %412 = vst [vmem:[#allocation5 + $0x228] sm:$0xff] %v252
    %413 = vst [vmem:[#allocation5 + $0x230] sm:$0xff] %v253
    %414 = vst [vmem:[#allocation5 + $0x238] sm:$0xff] %v254
    %415 = vst [vmem:[#allocation5 + $0x240] sm:$0xff] %v255
    %416 = vst [vmem:[#allocation5 + $0x248] sm:$0xff] %v256
    %417 = vst [vmem:[#allocation5 + $0x250] sm:$0xff] %v257
    %418 = vst [vmem:[#allocation5 + $0x258] sm:$0xff] %v258
    %419 = vst [vmem:[#allocation5 + $0x260] sm:$0xff] %v259
    %420 = vst [vmem:[#allocation5 + $0x268] sm:$0xff] %v260
    %421 = vst [vmem:[#allocation5 + $0x270] sm:$0xff] %v261
    %422 = vst [vmem:[#allocation5 + $0x278] sm:$0xff] %v262
    %423 = vst [vmem:[#allocation5 + $0x280] sm:$0xff] %v263
    %424 = vst [vmem:[#allocation5 + $0x288] sm:$0xff] %v264
    %425 = vst [vmem:[#allocation5 + $0x290] sm:$0xff] %v265
    %426 = vst [vmem:[#allocation5 + $0x298] sm:$0xff] %v266
    %427 = vst [vmem:[#allocation5 + $0x2a0] sm:$0xff] %v267
    %428 = vst [vmem:[#allocation5 + $0x2a8] sm:$0xff] %v268
    %429 = vst [vmem:[#allocation5 + $0x2b0] sm:$0xff] %v269
    %430 = vst [vmem:[#allocation5 + $0x2b8] sm:$0xff] %v270
    %431 = vst [vmem:[#allocation5 + $0x2c0] sm:$0xff] %v271
    %432 = vst [vmem:[#allocation5 + $0x2c8] sm:$0xff] %v272
    %433 = vst [vmem:[#allocation5 + $0x2d0] sm:$0xff] %v273
    %434 = vst [vmem:[#allocation5 + $0x2d8] sm:$0xff] %v274
    %435 = vst [vmem:[#allocation5 + $0x2e0] sm:$0xff] %v275
    %436 = vst [vmem:[#allocation5 + $0x2e8] sm:$0xff] %v276
    %437 = vst [vmem:[#allocation5 + $0x2f0] sm:$0xff] %v277
    %438 = vst [vmem:[#allocation5 + $0x2f8] sm:$0xff] %v278
    %439 = vst [vmem:[#allocation5 + $0x300] sm:$0xff] %v279
    %440 = vst [vmem:[#allocation5 + $0x308] sm:$0xff] %v280
    %441 = vst [vmem:[#allocation5 + $0x310] sm:$0xff] %v281
    %442 = vst [vmem:[#allocation5 + $0x318] sm:$0xff] %v282
    %443 = vst [vmem:[#allocation5 + $0x320] sm:$0xff] %v283
    %444 = vst [vmem:[#allocation5 + $0x328] sm:$0xff] %v284
    %445 = vst [vmem:[#allocation5 + $0x330] sm:$0xff] %v285
    %446 = vst [vmem:[#allocation5 + $0x338] sm:$0xff] %v286
    %447 = vst [vmem:[#allocation5 + $0x340] sm:$0xff] %v287
    %448 = vst [vmem:[#allocation5 + $0x348] sm:$0xff] %v288
    %449 = vst [vmem:[#allocation5 + $0x350] sm:$0xff] %v289
    %450 = vst [vmem:[#allocation5 + $0x358] sm:$0xff] %v290
    %451 = vst [vmem:[#allocation5 + $0x360] sm:$0xff] %v291
    %452 = vst [vmem:[#allocation5 + $0x368] sm:$0xff] %v292
    %453 = vst [vmem:[#allocation5 + $0x370] sm:$0xff] %v293
    %454 = vst [vmem:[#allocation5 + $0x378] sm:$0xff] %v294
    %455 = vst [vmem:[#allocation5 + $0x380] sm:$0xff] %v295
    %456 = vst [vmem:[#allocation5 + $0x388] sm:$0xff] %v296
    %457 = vst [vmem:[#allocation5 + $0x390] sm:$0xff] %v297
    %458 = vst [vmem:[#allocation5 + $0x398] sm:$0xff] %v298
    %459 = vst [vmem:[#allocation5 + $0x3a0] sm:$0xff] %v299
    %460 = vst [vmem:[#allocation5 + $0x3a8] sm:$0xff] %v300
    %461 = vst [vmem:[#allocation5 + $0x3b0] sm:$0xff] %v301
    %462 = vst [vmem:[#allocation5 + $0x3b8] sm:$0xff] %v302
    %463 = vst [vmem:[#allocation5 + $0x3c0] sm:$0xff] %v303
    %464 = vst [vmem:[#allocation5 + $0x3c8] sm:$0xff] %v304
    %465 = vst [vmem:[#allocation5 + $0x3d0] sm:$0xff] %v305
    %466 = vst [vmem:[#allocation5 + $0x3d8] sm:$0xff] %v306
    %467 = vst [vmem:[#allocation5 + $0x3e0] sm:$0xff] %v307
    %468 = vst [vmem:[#allocation5 + $0x3e8] sm:$0xff] %v308
    %469 = vst [vmem:[#allocation5 + $0x3f0] sm:$0xff] %v309
    %470 = vst [vmem:[#allocation5 + $0x3f8] sm:$0xff] %v310
    %471 = vst [vmem:[#allocation5 + $0x400] sm:$0xff] %v311
    %472 = vst [vmem:[#allocation5 + $0x408] sm:$0xff] %v312
    %473 = vst [vmem:[#allocation5 + $0x410] sm:$0xff] %v313
    %474 = vst [vmem:[#allocation5 + $0x418] sm:$0xff] %v314
    %475 = vst [vmem:[#allocation5 + $0x420] sm:$0xff] %v315
    %476 = vst [vmem:[#allocation5 + $0x428] sm:$0xff] %v316
    %477 = vst [vmem:[#allocation5 + $0x430] sm:$0xff] %v317
    %478 = vst [vmem:[#allocation5 + $0x438] sm:$0xff] %v318
    %479 = vst [vmem:[#allocation5 + $0x440] sm:$0xff] %v319
    %480 = vst [vmem:[#allocation5 + $0x448] sm:$0xff] %v320
    %481 = vst [vmem:[#allocation5 + $0x450] sm:$0xff] %v321
    %482 = vst [vmem:[#allocation5 + $0x458] sm:$0xff] %v322
    %483 = vst [vmem:[#allocation5 + $0x460] sm:$0xff] %v323
    %484 = vst [vmem:[#allocation5 + $0x468] sm:$0xff] %v324
    %485 = vst [vmem:[#allocation5 + $0x470] sm:$0xff] %v325
    %486 = vst [vmem:[#allocation5 + $0x478] sm:$0xff] %v326
    %487 = vst [vmem:[#allocation5 + $0x480] sm:$0xff] %v327
    %488 = vst [vmem:[#allocation5 + $0x488] sm:$0xff] %v328
    %489 = vst [vmem:[#allocation5 + $0x490] sm:$0xff] %v329
    %490 = vst [vmem:[#allocation5 + $0x498] sm:$0xff] %v330
    %491 = vst [vmem:[#allocation5 + $0x4a0] sm:$0xff] %v331
    %492 = vst [vmem:[#allocation5 + $0x4a8] sm:$0xff] %v332
    %493 = vst [vmem:[#allocation5 + $0x4b0] sm:$0xff] %v333
    %494 = vst [vmem:[#allocation5 + $0x4b8] sm:$0xff] %v334
    %495 = vst [vmem:[#allocation5 + $0x4c0] sm:$0xff] %v335
    %496 = vst [vmem:[#allocation5 + $0x4c8] sm:$0xff] %v336
    %497 = vst [vmem:[#allocation5 + $0x4d0] sm:$0xff] %v337
    %498 = vst [vmem:[#allocation5 + $0x4d8] sm:$0xff] %v338
    %499 = vst [vmem:[#allocation5 + $0x4e0] sm:$0xff] %v339
    %500 = vst [vmem:[#allocation5 + $0x4e8] sm:$0xff] %v340
    %501 = vst [vmem:[#allocation5 + $0x4f0] sm:$0xff] %v341
    %502 = vst [vmem:[#allocation5 + $0x4f8] sm:$0xff] %v342
    // Predicated region
    $region10: #{tpu_custom_call.1} parent=1 // pred_check
      _
    $region11: #{tpu_custom_call.1} parent=1 // pred_check_branch
      %504 = sbr.rel (0) target = $region13
    $region12: #{tpu_custom_call.1} parent=1 // pred_region
      %s506 = ssub.s32 20480, 20480
      %507 = vsyncadd [#allocation4], %s506
      %s508 = sshll.u32 [#allocation5], 4
      %s509 = int_to_ptr.vmem [resolvable:$true] %s508
      %514 = dma.vmem_to_hbm [thread:$0]  %s509, 20480, %s1, [#allocation4], 1024, 1024, 64
    $region13: #{tpu_custom_call.1} parent=1 // pred_fallthru
      _
    // Predicated region
    $region14: #{tpu_custom_call.1} parent=1 // pred_check
      _
    $region15: #{tpu_custom_call.1} parent=1 // pred_check_branch
      %516 = sbr.rel (0) target = $region17
    $region16: #{tpu_custom_call.1} parent=1 // pred_region
      %517 = dma.done [#allocation4], 20480
    $region17: #{tpu_custom_call.1} parent=1 // pred_fallthru
      _
    %518 = vsyncpa [#allocation3], 1
    %519 = vsyncpa [#allocation4], 1

</llo_original>
